<compile_context>
chip_gen: v7x
topology: tpu7x:2x2x1
jax: 0.10.0
libtpu: 0.0.40
codegen_flags: <defaults>
</compile_context>

<pallas_src>
import functools

import jax
import jax.numpy as jnp
from jax.experimental import pallas as pl
from jax.experimental.pallas import tpu as pltpu


def _fcomb_kernel(feat_ref, zb_ref, w0_ref, *refs, num_mid_layers, use_softmax):
    """Transposed-layout Fcomb body.

    feat_ref : (Cf, TP)    bf16 feature-map tile, channels x pixels
    zb_ref   : (C1, 1)     f32 per-batch bias = z @ W0[Cf:, :] + b0 (this batch)
    w0_ref   : (C1, Cf)    bf16 W0[:Cf, :].T
    refs     : [w_mid (M,C1,C1) bf16, b_mid (M,C1,1) f32,]   (only if M > 0)
               w_last (C, C1) bf16, b_last (C, 1) f32, out_ref (C, TP) f32
    """
    out_ref = refs[-1]
    if num_mid_layers > 0:
        wmid_ref, bmid_ref, wl_ref, bl_ref = refs[0], refs[1], refs[2], refs[3]
    else:
        wl_ref, bl_ref = refs[0], refs[1]

    x = feat_ref[...]                                                 # (Cf, TP) bf16
    h = jnp.dot(w0_ref[...], x, preferred_element_type=jnp.float32)  # (C1, TP) f32
    h = jnp.maximum(h + zb_ref[...], 0.0)                            # f32 elementwise

    for i in range(num_mid_layers):
        w = wmid_ref[i]                                               # (C1, C1) bf16
        b = bmid_ref[i]                                               # (C1, 1)  f32
        h = jnp.dot(w, h.astype(jnp.bfloat16),
                    preferred_element_type=jnp.float32)
        h = jnp.maximum(h + b, 0.0)

    logits = jnp.dot(wl_ref[...], h.astype(jnp.bfloat16),
                     preferred_element_type=jnp.float32) + bl_ref[...]  # (C, TP) f32

    if use_softmax:
        m = jnp.max(logits, axis=0, keepdims=True)
        e = jnp.exp(logits - m)
        denom = jnp.sum(e, axis=0, keepdims=True)
        out = e / denom            # exact divide: EUP slot, kernel is mem-bound
    else:
        out = logits

    out_ref[...] = out.astype(out_ref.dtype)


def _choose_tile_px(hw, batch, max_tile=1024):
    """Pick (tile_px, padded_hw).

    * tile_px is a multiple of 128 (or the full hw when hw <= 128).
    * for batch == 1 the pixel axis is split into >= 2 tiles when possible so
      both v7x TensorCores get grid work.
    * padded_hw is hw rounded up to a multiple of tile_px (padding handled in
      the wrapper; never a single oversized block).
    """
    if hw <= 128:
        return hw, hw
    tile = min(max_tile, ((hw + 127) // 128) * 128)
    if batch == 1 and hw >= 256:
        half_tiles = max(128, ((hw // 2) // 128) * 128)
        tile = min(tile, half_tiles)
    padded = ((hw + tile - 1) // tile) * tile
    return tile, padded


def fcomb_forward(feature_map, z, params, *, use_softmax=True, tile_px=None):
    """feature_map: (B, 16, H, W) NCHW; z: (B, latent_dim); params: list of (w, b).

    params[i] = (w, b) with w: (Cin, Cout), b: (Cout,); the first layer expects
    Cin = 16 + latent_dim (feature channels then z channels), matching the
    PyTorch Conv2d(16 + latent_dim, ...) 1x1 weight reinterpreted as a matmul.
    """
    B, Cf, H, W = feature_map.shape
    L = z.shape[1]
    HW = H * W
    num_classes = params[-1][0].shape[1]
    num_mid_layers = len(params) - 2     # hidden convs after the first one

    w0, b0 = params[0]
    assert w0.shape[0] == Cf + L, "first conv must take 16 + latent_dim channels"
    c1 = w0.shape[1]

    if tile_px is None:
        tile_px, padded_hw = _choose_tile_px(HW, B)
    else:
        padded_hw = ((HW + tile_px - 1) // tile_px) * tile_px

    # Free reshape: collapse spatial dims, channels on sublanes, pixels on lanes.
    feat = feature_map.reshape(B, Cf, HW)
    if padded_hw != HW:
        feat = jnp.pad(feat, ((0, 0), (0, 0), (0, padded_hw - HW)))
    feat = feat.astype(jnp.bfloat16)

    # Fold z into a per-batch bias (computed once, in f32):
    #   concat(feat, z_tiled) @ W0 + b0 == feat @ W0[:Cf] + (z @ W0[Cf:] + b0)
    w0_f32 = w0.astype(jnp.float32)
    zb = (z.astype(jnp.float32) @ w0_f32[Cf:, :]
          + b0.astype(jnp.float32))[:, :, None]                     # (B, C1, 1) f32
    w0f_t = jnp.transpose(w0_f32[:Cf, :]).astype(jnp.bfloat16)      # (C1, Cf) bf16

    grid = (B, padded_hw // tile_px)

    feat_spec = pl.BlockSpec((pl.Squeezed(), Cf, tile_px), lambda b, p: (b, 0, p))
    zb_spec = pl.BlockSpec((pl.Squeezed(), c1, 1), lambda b, p: (b, 0, 0))
    out_spec = pl.BlockSpec((pl.Squeezed(), num_classes, tile_px),
                            lambda b, p: (b, 0, p))

    def full_spec(a):
        zeros = (0,) * a.ndim
        return pl.BlockSpec(a.shape, lambda b, p: zeros)

    operands = [feat, zb, w0f_t]
    in_specs = [feat_spec, zb_spec, full_spec(w0f_t)]

    if num_mid_layers > 0:
        # Pack mid-layer weights/biases into single slabs (fewer refs/DMAs).
        w_mid = jnp.stack([jnp.transpose(w).astype(jnp.bfloat16)
                           for (w, _) in params[1:-1]])              # (M, C1, C1)
        b_mid = jnp.stack([b.reshape(-1, 1).astype(jnp.float32)
                           for (_, b) in params[1:-1]])              # (M, C1, 1)
        operands += [w_mid, b_mid]
        in_specs += [full_spec(w_mid), full_spec(b_mid)]

    w_last, b_last = params[-1]
    w_last_t = jnp.transpose(w_last).astype(jnp.bfloat16)            # (C, C1)
    b_last_c = b_last.reshape(-1, 1).astype(jnp.float32)             # (C, 1)
    operands += [w_last_t, b_last_c]
    in_specs += [full_spec(w_last_t), full_spec(b_last_c)]

    flops = 2 * B * HW * (Cf * c1 + num_mid_layers * c1 * c1 + c1 * num_classes)
    transcendentals = B * HW * num_classes if use_softmax else 0
    weight_bytes = (w0f_t.size + (num_mid_layers * c1 * c1) + w_last_t.size) * 2 \
        + (zb.size + num_mid_layers * c1 + b_last_c.size) * 4
    bytes_accessed = int(feat.size * 2 + B * num_classes * padded_hw * 4
                         + weight_bytes)

    kernel = functools.partial(
        _fcomb_kernel, num_mid_layers=num_mid_layers, use_softmax=use_softmax)

    out = pl.pallas_call(
        kernel,
        out_shape=jax.ShapeDtypeStruct((B, num_classes, padded_hw), jnp.float32),
        grid_spec=pltpu.PrefetchScalarGridSpec(
            num_scalar_prefetch=0,
            grid=grid,
            in_specs=in_specs,
            out_specs=out_spec,
        ),
        compiler_params=pltpu.CompilerParams(
            dimension_semantics=("parallel", "parallel"),
        ),
        cost_estimate=pl.CostEstimate(
            flops=flops,
            transcendentals=transcendentals,
            bytes_accessed=bytes_accessed,
        ),
    )(*operands)

    # Drop spatial padding, free reshape back to NCHW (no transpose needed).
    return out[:, :, :HW].reshape(B, num_classes, H, W)


def fcomb_reference(feature_map, z, params, use_softmax=True):
    """Pure-JAX f32 reference matching the PyTorch forward (for validation)."""
    B, Cf, H, W = feature_map.shape
    L = z.shape[1]
    zt = jnp.broadcast_to(z[:, :, None, None], (B, L, H, W))
    x = jnp.concatenate([feature_map, zt], axis=1)        # (B, Cf+L, H, W)
    x = jnp.transpose(x, (0, 2, 3, 1))                    # (B, H, W, Cin)
    for (w, b) in params[:-1]:
        x = jnp.maximum(x @ w + b, 0.0)
    w, b = params[-1]
    x = x @ w + b
    if use_softmax:
        x = jax.nn.softmax(x, axis=-1)
    return jnp.transpose(x, (0, 3, 1, 2))                 # (B, C, H, W)


def init_fcomb_params(key, latent_dim, num_filters0, num_classes, no_convs_fcomb):
    """Deterministic synthetic weights matching Fcomb's conv shapes.

    Conv2d(kernel_size=1) weight (Cout, Cin, 1, 1) is stored as a (Cin, Cout)
    matmul matrix; bias is (Cout,).
    """
    params = []
    dims = [16 + latent_dim] + [num_filters0] * (no_convs_fcomb - 1)
    for i in range(no_convs_fcomb - 1):
        key, kw, kb = jax.random.split(key, 3)
        cin, cout = dims[i], dims[i + 1]
        w = jax.random.normal(kw, (cin, cout), jnp.float32) * 0.1
        b = jax.random.normal(kb, (cout,), jnp.float32) * 0.01
        params.append((w, b))
    key, kw, kb = jax.random.split(key, 3)
    w = jax.random.normal(kw, (num_filters0, num_classes), jnp.float32) * 0.1
    b = jax.random.normal(kb, (num_classes,), jnp.float32) * 0.01
    params.append((w, b))
    return params


if __name__ == "__main__":
    # Small shapes consistent with the module: feature_map has 16 channels
    # (first conv expects 16 + latent_dim inputs).
    B, Cf, H, W = 2, 16, 16, 16
    latent_dim = 8
    num_filters0 = 32
    num_classes = 4
    no_convs_fcomb = 4  # conv+relu, 2x(conv+relu), last conv

    key = jax.random.PRNGKey(0)
    k_feat, k_z, k_params = jax.random.split(key, 3)

    feature_map = jax.random.normal(k_feat, (B, Cf, H, W), jnp.float32)
    z = jax.random.normal(k_z, (B, latent_dim), jnp.float32)
    params = init_fcomb_params(k_params, latent_dim, num_filters0,
                               num_classes, no_convs_fcomb)

    out = fcomb_forward(feature_map, z, params, use_softmax=True)
    out = jax.block_until_ready(out)

    assert out.shape == (B, num_classes, H, W)

    # softmax sanity: exact divide -> channel sums == 1 to f32 rounding
    sums = jnp.sum(out, axis=1)
    assert jnp.allclose(sums, jnp.ones_like(sums), atol=1e-4), \
        f"softmax sums off: max dev {float(jnp.max(jnp.abs(sums - 1.0)))}"

    # match the pure-JAX f32 reference (bf16 matmul operands -> loosened tol)
    ref = fcomb_reference(feature_map, z, params, use_softmax=True)
    assert jnp.allclose(out, ref, atol=5e-3, rtol=5e-3), \
        f"mismatch vs reference: max err {float(jnp.max(jnp.abs(out - ref)))}"

    print("KERNEL_OK")
</pallas_src>

<mosaic_0001>
module attributes {stable_mosaic.version = 11 : i64} {
  func.func @_fcomb_kernel(%arg0: i32, %arg1: i32, %arg2: memref<1x16x256xbf16, #tpu.memory_space<vmem>>, %arg3: memref<1x32x1xf32, #tpu.memory_space<vmem>>, %arg4: memref<32x16xbf16, #tpu.memory_space<vmem>>, %arg5: memref<2x32x32xbf16, #tpu.memory_space<vmem>>, %arg6: memref<2x32x1xf32, #tpu.memory_space<vmem>>, %arg7: memref<4x32xbf16, #tpu.memory_space<vmem>>, %arg8: memref<4x1xf32, #tpu.memory_space<vmem>>, %arg9: memref<1x4x256xf32, #tpu.memory_space<vmem>>) attributes {dimension_semantics = [#tpu.dimension_semantics<parallel>, #tpu.dimension_semantics<parallel>], iteration_bounds = array<i64: 2, 1>, scalar_prefetch = 0 : i64, scratch_operands = 0 : i64, tpu.core_type = #tpu.core_type<tc>, window_params = [{transform_indices = @transform_0, window_bounds = array<i64: 1, 16, 256>}, {transform_indices = @transform_1, window_bounds = array<i64: 1, 32, 1>}, {pipeline_mode = #tpu.pipeline_mode<synchronous>, transform_indices = @transform_2, window_bounds = array<i64: 32, 16>}, {pipeline_mode = #tpu.pipeline_mode<synchronous>, transform_indices = @transform_3, window_bounds = array<i64: 2, 32, 32>}, {pipeline_mode = #tpu.pipeline_mode<synchronous>, transform_indices = @transform_4, window_bounds = array<i64: 2, 32, 1>}, {pipeline_mode = #tpu.pipeline_mode<synchronous>, transform_indices = @transform_5, window_bounds = array<i64: 4, 32>}, {pipeline_mode = #tpu.pipeline_mode<synchronous>, transform_indices = @transform_6, window_bounds = array<i64: 4, 1>}, {transform_indices = @transform_7, window_bounds = array<i64: 1, 4, 256>}]} {
    %c0 = arith.constant 0 : index
    %c0_0 = arith.constant 0 : index
    %c0_1 = arith.constant 0 : index
    %0 = vector.load %arg2[%c0, %c0_0, %c0_1] : memref<1x16x256xbf16, #tpu.memory_space<vmem>>, vector<1x16x256xbf16>
    %1 = vector.shape_cast %0 : vector<1x16x256xbf16> to vector<16x256xbf16>
    %c0_2 = arith.constant 0 : index
    %c0_3 = arith.constant 0 : index
    %2 = vector.load %arg4[%c0_2, %c0_3] : memref<32x16xbf16, #tpu.memory_space<vmem>>, vector<32x16xbf16>
    %cst = arith.constant dense<0.000000e+00> : vector<32x256xf32>
    %3 = tpu.matmul %2, %1, %cst {dimension_numbers = #tpu.dot_dimension_numbers<[1], [0], [0], [1], [0, 0, 1, 1], [], []>} : vector<32x16xbf16>, vector<16x256xbf16>, vector<32x256xf32> -> vector<32x256xf32>
    %c0_4 = arith.constant 0 : index
    %c0_5 = arith.constant 0 : index
    %c0_6 = arith.constant 0 : index
    %4 = vector.load %arg3[%c0_4, %c0_5, %c0_6] : memref<1x32x1xf32, #tpu.memory_space<vmem>>, vector<1x32x1xf32>
    %5 = vector.shape_cast %4 : vector<1x32x1xf32> to vector<32x1xf32>
    %6 = vector.broadcast %5 : vector<32x1xf32> to vector<32x256xf32>
    %7 = arith.addf %3, %6 : vector<32x256xf32>
    %cst_7 = arith.constant 0.000000e+00 : f32
    %8 = vector.broadcast %cst_7 : f32 to vector<32x256xf32>
    %9 = arith.maximumf %7, %8 : vector<32x256xf32>
    %c0_8 = arith.constant 0 : index
    %c0_9 = arith.constant 0 : index
    %c0_10 = arith.constant 0 : index
    %10 = vector.load %arg5[%c0_8, %c0_9, %c0_10] : memref<2x32x32xbf16, #tpu.memory_space<vmem>>, vector<1x32x32xbf16>
    %11 = vector.shape_cast %10 : vector<1x32x32xbf16> to vector<32x32xbf16>
    %c0_11 = arith.constant 0 : index
    %c0_12 = arith.constant 0 : index
    %c0_13 = arith.constant 0 : index
    %12 = vector.load %arg6[%c0_11, %c0_12, %c0_13] : memref<2x32x1xf32, #tpu.memory_space<vmem>>, vector<1x32x1xf32>
    %13 = vector.shape_cast %12 : vector<1x32x1xf32> to vector<32x1xf32>
    %14 = arith.truncf %9 : vector<32x256xf32> to vector<32x256xbf16>
    %cst_14 = arith.constant dense<0.000000e+00> : vector<32x256xf32>
    %15 = tpu.matmul %11, %14, %cst_14 {dimension_numbers = #tpu.dot_dimension_numbers<[1], [0], [0], [1], [0, 0, 1, 1], [], []>} : vector<32x32xbf16>, vector<32x256xbf16>, vector<32x256xf32> -> vector<32x256xf32>
    %16 = vector.broadcast %13 : vector<32x1xf32> to vector<32x256xf32>
    %17 = arith.addf %15, %16 : vector<32x256xf32>
    %cst_15 = arith.constant 0.000000e+00 : f32
    %18 = vector.broadcast %cst_15 : f32 to vector<32x256xf32>
    %19 = arith.maximumf %17, %18 : vector<32x256xf32>
    %c1 = arith.constant 1 : index
    %c0_16 = arith.constant 0 : index
    %c0_17 = arith.constant 0 : index
    %20 = vector.load %arg5[%c1, %c0_16, %c0_17] : memref<2x32x32xbf16, #tpu.memory_space<vmem>>, vector<1x32x32xbf16>
    %21 = vector.shape_cast %20 : vector<1x32x32xbf16> to vector<32x32xbf16>
    %c1_18 = arith.constant 1 : index
    %c0_19 = arith.constant 0 : index
    %c0_20 = arith.constant 0 : index
    %22 = vector.load %arg6[%c1_18, %c0_19, %c0_20] : memref<2x32x1xf32, #tpu.memory_space<vmem>>, vector<1x32x1xf32>
    %23 = vector.shape_cast %22 : vector<1x32x1xf32> to vector<32x1xf32>
    %24 = arith.truncf %19 : vector<32x256xf32> to vector<32x256xbf16>
    %cst_21 = arith.constant dense<0.000000e+00> : vector<32x256xf32>
    %25 = tpu.matmul %21, %24, %cst_21 {dimension_numbers = #tpu.dot_dimension_numbers<[1], [0], [0], [1], [0, 0, 1, 1], [], []>} : vector<32x32xbf16>, vector<32x256xbf16>, vector<32x256xf32> -> vector<32x256xf32>
    %26 = vector.broadcast %23 : vector<32x1xf32> to vector<32x256xf32>
    %27 = arith.addf %25, %26 : vector<32x256xf32>
    %cst_22 = arith.constant 0.000000e+00 : f32
    %28 = vector.broadcast %cst_22 : f32 to vector<32x256xf32>
    %29 = arith.maximumf %27, %28 : vector<32x256xf32>
    %c0_23 = arith.constant 0 : index
    %c0_24 = arith.constant 0 : index
    %30 = vector.load %arg7[%c0_23, %c0_24] : memref<4x32xbf16, #tpu.memory_space<vmem>>, vector<4x32xbf16>
    %31 = arith.truncf %29 : vector<32x256xf32> to vector<32x256xbf16>
    %cst_25 = arith.constant dense<0.000000e+00> : vector<4x256xf32>
    %32 = tpu.matmul %30, %31, %cst_25 {dimension_numbers = #tpu.dot_dimension_numbers<[1], [0], [0], [1], [0, 0, 1, 1], [], []>} : vector<4x32xbf16>, vector<32x256xbf16>, vector<4x256xf32> -> vector<4x256xf32>
    %c0_26 = arith.constant 0 : index
    %c0_27 = arith.constant 0 : index
    %33 = vector.load %arg8[%c0_26, %c0_27] : memref<4x1xf32, #tpu.memory_space<vmem>>, vector<4x1xf32>
    %34 = vector.broadcast %33 : vector<4x1xf32> to vector<4x256xf32>
    %35 = arith.addf %32, %34 : vector<4x256xf32>
    %cst_28 = arith.constant dense<0xFF800000> : vector<256xf32>
    %36 = vector.multi_reduction <maximumf>, %35, %cst_28 [0] : vector<4x256xf32> to vector<256xf32>
    %37 = vector.shape_cast %36 : vector<256xf32> to vector<1x256xf32>
    %38 = vector.broadcast %37 : vector<1x256xf32> to vector<4x256xf32>
    %39 = arith.subf %35, %38 : vector<4x256xf32>
    %40 = math.exp %39 : vector<4x256xf32>
    %cst_29 = arith.constant dense<0.000000e+00> : vector<256xf32>
    %41 = vector.multi_reduction <add>, %40, %cst_29 [0] : vector<4x256xf32> to vector<256xf32>
    %42 = vector.shape_cast %41 : vector<256xf32> to vector<1x256xf32>
    %43 = vector.broadcast %42 : vector<1x256xf32> to vector<4x256xf32>
    %44 = arith.divf %40, %43 : vector<4x256xf32>
    %c0_30 = arith.constant 0 : index
    %c0_31 = arith.constant 0 : index
    %c0_32 = arith.constant 0 : index
    %45 = vector.load %arg9[%c0_30, %c0_31, %c0_32] : memref<1x4x256xf32, #tpu.memory_space<vmem>>, vector<1x4x256xf32>
    %46 = vector.shape_cast %45 : vector<1x4x256xf32> to vector<4x256xf32>
    %47 = vector.shape_cast %44 : vector<4x256xf32> to vector<1x4x256xf32>
    tpu.vector_store %arg9[%c0_30, %c0_31, %c0_32], %47 {strides = array<i32>} : memref<1x4x256xf32, #tpu.memory_space<vmem>>, vector<1x4x256xf32>,
    return
  }
  func.func @transform_0(%arg0: i32, %arg1: i32) -> (i32, i32, i32) {
    %c0_i32 = arith.constant 0 : i32
    %c0_i32_0 = arith.constant 0 : i32
    return %arg0, %c0_i32, %arg1 : i32, i32, i32
  }
  func.func @transform_1(%arg0: i32, %arg1: i32) -> (i32, i32, i32) {
    %c0_i32 = arith.constant 0 : i32
    %c0_i32_0 = arith.constant 0 : i32
    %c0_i32_1 = arith.constant 0 : i32
    return %arg0, %c0_i32, %c0_i32_0 : i32, i32, i32
  }
  func.func @transform_2(%arg0: i32, %arg1: i32) -> (i32, i32) {
    %c0_i32 = arith.constant 0 : i32
    %c0_i32_0 = arith.constant 0 : i32
    %c0_i32_1 = arith.constant 0 : i32
    return %c0_i32, %c0_i32_0 : i32, i32
  }
  func.func @transform_3(%arg0: i32, %arg1: i32) -> (i32, i32, i32) {
    %c0_i32 = arith.constant 0 : i32
    %c0_i32_0 = arith.constant 0 : i32
    %c0_i32_1 = arith.constant 0 : i32
    %c0_i32_2 = arith.constant 0 : i32
    return %c0_i32, %c0_i32_0, %c0_i32_1 : i32, i32, i32
  }
  func.func @transform_4(%arg0: i32, %arg1: i32) -> (i32, i32, i32) {
    %c0_i32 = arith.constant 0 : i32
    %c0_i32_0 = arith.constant 0 : i32
    %c0_i32_1 = arith.constant 0 : i32
    %c0_i32_2 = arith.constant 0 : i32
    return %c0_i32, %c0_i32_0, %c0_i32_1 : i32, i32, i32
  }
  func.func @transform_5(%arg0: i32, %arg1: i32) -> (i32, i32) {
    %c0_i32 = arith.constant 0 : i32
    %c0_i32_0 = arith.constant 0 : i32
    %c0_i32_1 = arith.constant 0 : i32
    return %c0_i32, %c0_i32_0 : i32, i32
  }
  func.func @transform_6(%arg0: i32, %arg1: i32) -> (i32, i32) {
    %c0_i32 = arith.constant 0 : i32
    %c0_i32_0 = arith.constant 0 : i32
    %c0_i32_1 = arith.constant 0 : i32
    return %c0_i32, %c0_i32_0 : i32, i32
  }
  func.func @transform_7(%arg0: i32, %arg1: i32) -> (i32, i32, i32) {
    %c0_i32 = arith.constant 0 : i32
    %c0_i32_0 = arith.constant 0 : i32
    return %arg0, %c0_i32, %arg1 : i32, i32, i32
  }
}

</mosaic_0001>

<llo_original>
// kernel: tpu_custom_call.1
$region0: #{tpu_custom_call.1}
  #allocation0 [shape = 'u32[]', space=smem, size = 0x4, offset = 0x4, fixed_abs, tag = 'smem constant byte address 0x4 - core index']
  #allocation1 [shape = 'u32[144,128]{1,0:T(1,128)}', space=vmem, size = 0x12000, scoped, tag = 'internal scratch']
  %s0 = inlined_call_operand.vmem [shape: bf16[2,16,256], index: 0, kind: input, shape index: {}]
  %s1 = inlined_call_operand.vmem [shape: f32[2,32,1], index: 1, kind: input, shape index: {}]
  %s2 = inlined_call_operand.vmem [shape: bf16[32,16], index: 2, kind: input, shape index: {}]
  %s3 = inlined_call_operand.vmem [shape: bf16[2,32,32], index: 3, kind: input, shape index: {}]
  %s4 = inlined_call_operand.vmem [shape: f32[2,32,1], index: 4, kind: input, shape index: {}]
  %s5 = inlined_call_operand.vmem [shape: bf16[4,32], index: 5, kind: input, shape index: {}]
  %s6 = inlined_call_operand.vmem [shape: f32[4,1], index: 6, kind: input, shape index: {}]
  %s7 = inlined_call_operand.hbm [shape: f32[2,4,256], index: 7, kind: output, shape index: {}]
  %s8 = sld [smem:[#allocation0]]
  $region61: #{tpu_custom_call.1} parent=0
    _
  %s10 = ssub.s32 1, %s8
  %s11 = scalar_select 0, %s10, %s8
  $region1: #{tpu_custom_call.1} parent=0
    #allocation2 [shape = 'u8[8192]{0}', space=vmem, size = 0x2000, scoped, tag = 'output window, operand 0']
    #allocation3 [shape = 's32[2]{0}', space=sflag, size = 0x8, scoped, tag = 'scoped memory for tpu_custom_call.1']
    %12 = vsyncpa [#allocation3], 0
    %s13 = scalar_lea.sflag [#allocation3], 1
    %14 = vsyncpa %s13, 0
    loop: start=0, step=1, limit=4
    $region2: #{tpu_custom_call.1} parent=1 // loop_pre_header
      _
    $region3: #{tpu_custom_call.1} parent=1 // loop_header
      %s16 = sphi 0, %s20
      %p17 = scmp.ge.s32.totalorder %s16, 4
      %s23 = sphi 0, %s35
      %s24 = sphi 0, %s31
      %s25 = sphi 0, %s23
      %s26 = sphi 0, %s24
      %s27 = sphi 0, %s25
      %s28 = sphi 0, %s26
      %s40 = sphi 0, %s42
      %s43 = sphi 0, %s40
      %s44 = sphi 0, %s43
      %s60 = sphi 0, %s44
      %s66 = sphi 0, %s68
      %s69 = sphi 0, %s66
      %s70 = sphi 0, %s69
      %s86 = sphi 0, %s70
      %s90 = sphi 0, %s90
      %s92 = sphi 0, %s90
      %s93 = sphi 0, %s92
      %s107 = sphi 0, %s93
      %s111 = sphi 0, %s111
      %s113 = sphi 0, %s111
      %s114 = sphi 0, %s113
      %s128 = sphi 0, %s114
      %s132 = sphi 0, %s132
      %s134 = sphi 0, %s132
      %s135 = sphi 0, %s134
      %s149 = sphi 0, %s135
      %s153 = sphi 0, %s153
      %s155 = sphi 0, %s153
      %s156 = sphi 0, %s155
      %s170 = sphi 0, %s156
      %s174 = sphi 0, %s174
      %s176 = sphi 0, %s174
      %s177 = sphi 0, %s176
      %s191 = sphi 0, %s177
      %s199 = sphi 0, %s201
      %s202 = sphi 0, %s199
      %s203 = sphi 0, %s202
      %s219 = sphi 0, %s203
    $region4: #{tpu_custom_call.1} parent=1 // loop_header_branch
      %19 = sbr.rel (%p17) target = $region8
    $region5: #{tpu_custom_call.1} parent=1 // loop_body
      %s21 = ssub.s32 %s16, 1
      %s22 = ssub.s32 %s16, 2
      %s29 = sadd.s32 1, %s24
      %p30 = scmp.ge.s32.totalorder %s29, 1
      %s31 = scalar_select %p30, 0, %s29
      %s32 = sadd.s32 1, %s23
      %s33 = scalar_select %p30, %s32, %s23
      %p34 = scmp.ge.s32.totalorder %s33, 2
      %s35 = scalar_select %p34, 0, %s33
      %s36 = ssub.s32 %s23, %s35
      %s37 = ssub.s32 %s24, %s31
      %s38 = sor.u32 %s36, %s37
      %p39 = scmp.eq.s32.totalorder %s38, 0
      %s41 = sadd.s32 %s40, 1
      %s42 = scalar_select %p39, %s40, %s41
      %p45 = pneg %p39
      %p46 = scmp.eq.s32.totalorder %s16, 1
      %p47 = por %p45, %p46
      %p48 = scmp.ne.s32.totalorder %s40, %s43
      %p49 = scmp.eq.s32.totalorder %s16, 0
      %p50 = por %p48, %p49
      %p51 = scmp.ne.s32.totalorder %s40, %s43
      %p52 = scmp.eq.s32.totalorder %s21, 1
      %p53 = por %p51, %p52
      %p54 = scmp.ne.s32.totalorder %s43, %s44
      %p55 = scmp.eq.s32.totalorder %s21, 0
      %p56 = por %p54, %p55
      %p57 = scmp.ne.s32.totalorder %s43, %s44
      %p58 = scmp.eq.s32.totalorder %s22, 1
      %p59 = por %p57, %p58
      %p61 = scmp.ne.s32.totalorder %s44, %s60
      %p62 = scmp.eq.s32.totalorder %s22, 0
      %p63 = por %p61, %p62
      %s64 = ssub.s32 %s23, %s35
      %p65 = scmp.eq.s32.totalorder %s64, 0
      %s67 = sadd.s32 %s66, 1
      %s68 = scalar_select %p65, %s66, %s67
      %p71 = pneg %p65
      %p72 = scmp.eq.s32.totalorder %s16, 1
      %p73 = por %p71, %p72
      %p74 = scmp.ne.s32.totalorder %s66, %s69
      %p75 = scmp.eq.s32.totalorder %s16, 0
      %p76 = por %p74, %p75
      %p77 = scmp.ne.s32.totalorder %s66, %s69
      %p78 = scmp.eq.s32.totalorder %s21, 1
      %p79 = por %p77, %p78
      %p80 = scmp.ne.s32.totalorder %s69, %s70
      %p81 = scmp.eq.s32.totalorder %s21, 0
      %p82 = por %p80, %p81
      %p83 = scmp.ne.s32.totalorder %s69, %s70
      %p84 = scmp.eq.s32.totalorder %s22, 1
      %p85 = por %p83, %p84
      %p87 = scmp.ne.s32.totalorder %s70, %s86
      %p88 = scmp.eq.s32.totalorder %s22, 0
      %p89 = por %p87, %p88
      %s91 = sadd.s32 %s90, 1
      %p94 = scmp.eq.s32.totalorder %s16, 1
      %p95 = scmp.ne.s32.totalorder %s90, %s92
      %p96 = scmp.eq.s32.totalorder %s16, 0
      %p97 = por %p95, %p96
      %p98 = scmp.ne.s32.totalorder %s90, %s92
      %p99 = scmp.eq.s32.totalorder %s21, 1
      %p100 = por %p98, %p99
      %p101 = scmp.ne.s32.totalorder %s92, %s93
      %p102 = scmp.eq.s32.totalorder %s21, 0
      %p103 = por %p101, %p102
      %p104 = scmp.ne.s32.totalorder %s92, %s93
      %p105 = scmp.eq.s32.totalorder %s22, 1
      %p106 = por %p104, %p105
      %p108 = scmp.ne.s32.totalorder %s93, %s107
      %p109 = scmp.eq.s32.totalorder %s22, 0
      %p110 = por %p108, %p109
      %s112 = sadd.s32 %s111, 1
      %p115 = scmp.eq.s32.totalorder %s16, 1
      %p116 = scmp.ne.s32.totalorder %s111, %s113
      %p117 = scmp.eq.s32.totalorder %s16, 0
      %p118 = por %p116, %p117
      %p119 = scmp.ne.s32.totalorder %s111, %s113
      %p120 = scmp.eq.s32.totalorder %s21, 1
      %p121 = por %p119, %p120
      %p122 = scmp.ne.s32.totalorder %s113, %s114
      %p123 = scmp.eq.s32.totalorder %s21, 0
      %p124 = por %p122, %p123
      %p125 = scmp.ne.s32.totalorder %s113, %s114
      %p126 = scmp.eq.s32.totalorder %s22, 1
      %p127 = por %p125, %p126
      %p129 = scmp.ne.s32.totalorder %s114, %s128
      %p130 = scmp.eq.s32.totalorder %s22, 0
      %p131 = por %p129, %p130
      %s133 = sadd.s32 %s132, 1
      %p136 = scmp.eq.s32.totalorder %s16, 1
      %p137 = scmp.ne.s32.totalorder %s132, %s134
      %p138 = scmp.eq.s32.totalorder %s16, 0
      %p139 = por %p137, %p138
      %p140 = scmp.ne.s32.totalorder %s132, %s134
      %p141 = scmp.eq.s32.totalorder %s21, 1
      %p142 = por %p140, %p141
      %p143 = scmp.ne.s32.totalorder %s134, %s135
      %p144 = scmp.eq.s32.totalorder %s21, 0
      %p145 = por %p143, %p144
      %p146 = scmp.ne.s32.totalorder %s134, %s135
      %p147 = scmp.eq.s32.totalorder %s22, 1
      %p148 = por %p146, %p147
      %p150 = scmp.ne.s32.totalorder %s135, %s149
      %p151 = scmp.eq.s32.totalorder %s22, 0
      %p152 = por %p150, %p151
      %s154 = sadd.s32 %s153, 1
      %p157 = scmp.eq.s32.totalorder %s16, 1
      %p158 = scmp.ne.s32.totalorder %s153, %s155
      %p159 = scmp.eq.s32.totalorder %s16, 0
      %p160 = por %p158, %p159
      %p161 = scmp.ne.s32.totalorder %s153, %s155
      %p162 = scmp.eq.s32.totalorder %s21, 1
      %p163 = por %p161, %p162
      %p164 = scmp.ne.s32.totalorder %s155, %s156
      %p165 = scmp.eq.s32.totalorder %s21, 0
      %p166 = por %p164, %p165
      %p167 = scmp.ne.s32.totalorder %s155, %s156
      %p168 = scmp.eq.s32.totalorder %s22, 1
      %p169 = por %p167, %p168
      %p171 = scmp.ne.s32.totalorder %s156, %s170
      %p172 = scmp.eq.s32.totalorder %s22, 0
      %p173 = por %p171, %p172
      %s175 = sadd.s32 %s174, 1
      %p178 = scmp.eq.s32.totalorder %s16, 1
      %p179 = scmp.ne.s32.totalorder %s174, %s176
      %p180 = scmp.eq.s32.totalorder %s16, 0
      %p181 = por %p179, %p180
      %p182 = scmp.ne.s32.totalorder %s174, %s176
      %p183 = scmp.eq.s32.totalorder %s21, 1
      %p184 = por %p182, %p183
      %p185 = scmp.ne.s32.totalorder %s176, %s177
      %p186 = scmp.eq.s32.totalorder %s21, 0
      %p187 = por %p185, %p186
      %p188 = scmp.ne.s32.totalorder %s176, %s177
      %p189 = scmp.eq.s32.totalorder %s22, 1
      %p190 = por %p188, %p189
      %p192 = scmp.ne.s32.totalorder %s177, %s191
      %p193 = scmp.eq.s32.totalorder %s22, 0
      %p194 = por %p192, %p193
      %s195 = ssub.s32 %s23, %s35
      %s196 = ssub.s32 %s24, %s31
      %s197 = sor.u32 %s195, %s196
      %p198 = scmp.eq.s32.totalorder %s197, 0
      %s200 = sadd.s32 %s199, 1
      %s201 = scalar_select %p198, %s199, %s200
      %p204 = pneg %p198
      %p205 = scmp.eq.s32.totalorder %s16, 1
      %p206 = por %p204, %p205
      %p207 = scmp.ne.s32.totalorder %s199, %s202
      %p208 = scmp.eq.s32.totalorder %s16, 0
      %p209 = por %p207, %p208
      %p210 = scmp.ne.s32.totalorder %s199, %s202
      %p211 = scmp.eq.s32.totalorder %s21, 1
      %p212 = por %p210, %p211
      %p213 = scmp.ne.s32.totalorder %s202, %s203
      %p214 = scmp.eq.s32.totalorder %s21, 0
      %p215 = por %p213, %p214
      %p216 = scmp.ne.s32.totalorder %s202, %s203
      %p217 = scmp.eq.s32.totalorder %s22, 1
      %p218 = por %p216, %p217
      %p220 = scmp.ne.s32.totalorder %s203, %s219
      %p221 = scmp.eq.s32.totalorder %s22, 0
      %p222 = por %p220, %p221
      %p223 = scmp.le.s32.totalorder 1, %s16
      %p224 = scmp.lt.s32.totalorder %s16, 3
      %p225 = pnand %p223, %p224
      %p226 = pneg %p225
      // Predicated region
      $region9: #{tpu_custom_call.1} parent=5 // pred_check
        _
      $region10: #{tpu_custom_call.1} parent=5 // pred_check_branch
        %228 = sbr.rel (%p225) target = $region12
      $region11: #{tpu_custom_call.1} parent=5 // pred_region
        %s229 = ssub.s32 %s16, 1
        // Predicated region
        $region13: #{tpu_custom_call.1} parent=11 // pred_check
          %p230 = pneg %p103
        $region14: #{tpu_custom_call.1} parent=11 // pred_check_branch
          %232 = sbr.rel (%p230) target = $region16
        $region15: #{tpu_custom_call.1} parent=11 // pred_region
          _
        $region16: #{tpu_custom_call.1} parent=11 // pred_fallthru
          _
        // Predicated region
        $region17: #{tpu_custom_call.1} parent=11 // pred_check
          %p233 = pneg %p124
        $region18: #{tpu_custom_call.1} parent=11 // pred_check_branch
          %235 = sbr.rel (%p233) target = $region20
        $region19: #{tpu_custom_call.1} parent=11 // pred_region
          _
        $region20: #{tpu_custom_call.1} parent=11 // pred_fallthru
          _
        // Predicated region
        $region21: #{tpu_custom_call.1} parent=11 // pred_check
          %p236 = pneg %p145
        $region22: #{tpu_custom_call.1} parent=11 // pred_check_branch
          %238 = sbr.rel (%p236) target = $region24
        $region23: #{tpu_custom_call.1} parent=11 // pred_region
          _
        $region24: #{tpu_custom_call.1} parent=11 // pred_fallthru
          _
        // Predicated region
        $region25: #{tpu_custom_call.1} parent=11 // pred_check
          %p239 = pneg %p166
        $region26: #{tpu_custom_call.1} parent=11 // pred_check_branch
          %241 = sbr.rel (%p239) target = $region28
        $region27: #{tpu_custom_call.1} parent=11 // pred_region
          _
        $region28: #{tpu_custom_call.1} parent=11 // pred_fallthru
          _
        // Predicated region
        $region29: #{tpu_custom_call.1} parent=11 // pred_check
          %p242 = pneg %p187
        $region30: #{tpu_custom_call.1} parent=11 // pred_check_branch
          %244 = sbr.rel (%p242) target = $region32
        $region31: #{tpu_custom_call.1} parent=11 // pred_region
          _
        $region32: #{tpu_custom_call.1} parent=11 // pred_fallthru
          _
      $region12: #{tpu_custom_call.1} parent=5 // pred_fallthru
        _
      %p245 = scmp.lt.s32.totalorder %s16, 2
      // Predicated region
      $region33: #{tpu_custom_call.1} parent=5 // pred_check
        %p246 = pneg %p245
      $region34: #{tpu_custom_call.1} parent=5 // pred_check_branch
        %248 = sbr.rel (%p246) target = $region36
      $region35: #{tpu_custom_call.1} parent=5 // pred_region
        // Predicated region
        $region37: #{tpu_custom_call.1} parent=35 // pred_check
          %p249 = pneg %p50
        $region38: #{tpu_custom_call.1} parent=35 // pred_check_branch
          %251 = sbr.rel (%p249) target = $region40
        $region39: #{tpu_custom_call.1} parent=35 // pred_region
          %s252 = smul.u32 2, %s24
          %p253 = scmp.lt.s32.totalorder %s23, 1
          %s254 = scalar_select %p253, %s23, 1
          %p255 = scmp.lt.s32.totalorder %s252, 1
          %s256 = scalar_select %p255, %s252, 1
          %s257 = smul.addr %s254, 4
          %s258 = sadd.s32 %s256, %s257
          %s259 = smul.addr %s258, 4
          %s260 = scalar_lea.vmem %s0, %s259
          %s261 = smul.u32 2, %s24
        $region40: #{tpu_custom_call.1} parent=35 // pred_fallthru
          _
        // Predicated region
        $region41: #{tpu_custom_call.1} parent=35 // pred_check
          %p262 = pneg %p76
        $region42: #{tpu_custom_call.1} parent=35 // pred_check_branch
          %264 = sbr.rel (%p262) target = $region44
        $region43: #{tpu_custom_call.1} parent=35 // pred_region
          %p265 = scmp.lt.s32.totalorder %s23, 1
          %s266 = scalar_select %p265, %s23, 1
          %s267 = smul.addr %s266, 4
          %s268 = smul.addr %s267, 8
          %s269 = scalar_lea.vmem %s1, %s268
        $region44: #{tpu_custom_call.1} parent=35 // pred_fallthru
          _
      $region36: #{tpu_custom_call.1} parent=5 // pred_fallthru
        _
      %p270 = scmp.le.s32.totalorder 1, %s16
      %p271 = scmp.lt.s32.totalorder %s16, 3
      %p272 = pnand %p270, %p271
      %p273 = pneg %p272
      // Predicated region
      $region45: #{tpu_custom_call.1} parent=5 // pred_check
        _
      $region46: #{tpu_custom_call.1} parent=5 // pred_check_branch
        %275 = sbr.rel (%p272) target = $region48
      $region47: #{tpu_custom_call.1} parent=5 // pred_region
        %s276 = ssub.s32 %s16, 1
        %s277 = smul.u32 2, %s26
        %p278 = scmp.lt.s32.totalorder %s25, 1
        %s279 = scalar_select %p278, %s25, 1
        %p280 = scmp.lt.s32.totalorder %s277, 1
        %s281 = scalar_select %p280, %s277, 1
        %s282 = smul.addr %s279, 4
        %s283 = sadd.s32 %s281, %s282
        %s284 = smul.addr %s283, 4
        %s285 = scalar_lea.vmem %s0, %s284
        %p286 = pneg %p56
        %p287 = pneg %p53
        %p288 = scmp.lt.s32.totalorder %s25, 1
        %s289 = scalar_select %p288, %s25, 1
        %s290 = smul.addr %s289, 4
        %s291 = smul.addr %s290, 8
        %s292 = scalar_lea.vmem %s1, %s291
        %p293 = pneg %p82
        %p294 = pneg %p79
        %p295 = pneg %p103
        %p296 = pneg %p100
        %p297 = pneg %p124
        %p298 = pneg %p121
        %p299 = pneg %p145
        %p300 = pneg %p142
        %p301 = pneg %p166
        %p302 = pneg %p163
        %p303 = pneg %p187
        %p304 = pneg %p184
        %p305 = pneg %p215
        %p306 = pneg %p212
        %s307 = sand.u32 %s202, 1
        %s308 = scalar_lea.sflag [#allocation3], %s307
        %s309 = sand.u32 %s202, 1
        %s310 = smul.addr %s309, 8
        %s311 = scalar_lea.vmem [#allocation2], %s310
        %s312 = smul.u32 2, %s26
        %p313 = scmp.lt.s32.totalorder %s25, 1
        %s314 = scalar_select %p313, %s25, 1
        %p315 = scmp.lt.s32.totalorder %s312, 1
        %s316 = scalar_select %p315, %s312, 1
        %s317 = smul.addr %s314, 4
        %s318 = sadd.s32 %s316, %s317
        %s319 = smul.addr %s318, 4
        %s320 = scalar_lea.vmem %s0, %s319
        %s321 = smul.u32 2, %s26
        %p322 = scmp.lt.s32.totalorder %s25, 1
        %s323 = scalar_select %p322, %s25, 1
        %s324 = smul.addr %s323, 4
        %s325 = smul.addr %s324, 8
        %s326 = scalar_lea.vmem %s1, %s325
        %s327 = smul.u32 2, %s26
        %v329 = vld [vmem:[%s320] sm:$0xff]
        %v330 = vld [vmem:[%s320 + $0x8] sm:$0xff]
        %v331 = vld [vmem:[%s2] sm:$0xf]
        %v332 = vld [vmem:[%s2 + $0x4] sm:$0xf]
        %v333 = vld [vmem:[%s2 + $0x8] sm:$0xf]
        %v334 = vld [vmem:[%s2 + $0xc] sm:$0xf]
        %v335 = vld [vmem:[%s326] sm:$0xff]
        %v336 = vld [vmem:[%s326 + $0x8] sm:$0xff]
        %v337 = vld [vmem:[%s326 + $0x10] sm:$0xff]
        %v338 = vld [vmem:[%s326 + $0x18] sm:$0xff]
        %340 = vset.pattern.permute.xlu0 0
        %341 = vperm.xlu0 %340, %v335
        %v342 = vpop.permute.xlu0 %341
        %345 = vset.pattern.permute.xlu0 0
        %346 = vperm.xlu0 %345, %v336
        %v347 = vpop.permute.xlu0 %346
        %350 = vset.pattern.permute.xlu0 0
        %351 = vperm.xlu0 %350, %v337
        %v352 = vpop.permute.xlu0 %351
        %355 = vset.pattern.permute.xlu0 0
        %356 = vperm.xlu0 %355, %v338
        %v357 = vpop.permute.xlu0 %356
        %v363 = vunpack.c.l.b16 %v331
        %v364 = vunpack.c.l.b16 %v332
        %v365 = vunpack.c.l.b16 %v333
        %v366 = vunpack.c.l.b16 %v334
        %v367 = vpack.c.b16 %v364, %v363
        %v368 = vpack.c.b16 %v366, %v365
        %v371 = vunpack.c.l.b16 %v329
        %v372 = vunpack.c.h.b16 %v329
        %v373 = vunpack.c.l.b16 %v330
        %v374 = vunpack.c.h.b16 %v330
        %v375 = vpack.c.b16 %v373, %v371
        %v376 = vpack.c.b16 %v374, %v372
        %vm379 = vcmask 130048
        %v381 = vsel %vm379, %v367, 0
        %v384 = vsel %vm379, %v368, 0
        %386 = vmatprep.subr.bf16.mxu0 %v376
        %387 = vmatpush1.bf16.msra.mxu0 %v375
        %388 = vmatprep.subr.bf16.mxu0 0
        %389 = vmatpush1.bf16.msra.mxu0 0
        %390 = vmatprep.subr.bf16.mxu0 0
        %391 = vmatpush1.bf16.msra.mxu0 0
        %392 = vmatprep.subr.bf16.mxu0 0
        %393 = vmatpush1.bf16.msra.mxu0 0
        %394 = vmatprep.subr.bf16.mxu0 0
        %395 = vmatpush1.bf16.msra.mxu0 0
        %396 = vmatprep.subr.bf16.mxu0 0
        %397 = vmatpush1.bf16.msra.mxu0 0
        %398 = vmatprep.subr.bf16.mxu0 0
        %399 = vmatpush1.bf16.msra.mxu0 0
        %400 = vmatprep.subr.bf16.mxu0 0
        %401 = vmatpush1.bf16.msra.mxu0 0
        %402 = vmatprep.subr.bf16.mxu0 0
        %403 = vmatpush1.bf16.msra.mxu0 0
        %404 = vmatprep.subr.bf16.mxu0 0
        %405 = vmatpush1.bf16.msra.mxu0 0
        %406 = vmatprep.subr.bf16.mxu0 0
        %407 = vmatpush1.bf16.msra.mxu0 0
        %408 = vmatprep.subr.bf16.mxu0 0
        %409 = vmatpush1.bf16.msra.mxu0 0
        %410 = vmatprep.subr.bf16.mxu0 0
        %411 = vmatpush1.bf16.msra.mxu0 0
        %412 = vmatprep.subr.bf16.mxu0 0
        %413 = vmatpush1.bf16.msra.mxu0 0
        %414 = vmatprep.subr.bf16.mxu0 0
        %415 = vmatpush1.bf16.msra.mxu0 0
        %416 = vmatprep.subr.bf16.mxu0 0
        %417 = vmatpush1.bf16.msra.mxu0 0
        %418 = vmatprep.mubr.bf16.mxu0 0
        %419 = vmatmul.mubr.bf16.gmra.mrb[0].mxu0 %v381
        %v420 = vpop.f32.mrb[0].mxu0
        %v421 = vadd.f32 %v342, %v420
        %v422 = vpop.f32.mrb[0].mxu0
        %v423 = vadd.f32 %v342, %v422
        %v424 = vpop.f32.mrb[0].mxu0
        %v425 = vadd.f32 %v347, %v424
        %v426 = vpop.f32.mrb[0].mxu0
        %v427 = vadd.f32 %v347, %v426
        %428 = vmatprep.mubr.bf16.mxu0 0
        %429 = vmatmul.mubr.bf16.gmra.mrb[0].mxu0 %v384
        %v430 = vpop.f32.mrb[0].mxu0
        %v431 = vadd.f32 %v352, %v430
        %v432 = vpop.f32.mrb[0].mxu0
        %v433 = vadd.f32 %v352, %v432
        %v434 = vpop.f32.mrb[0].mxu0
        %v435 = vadd.f32 %v357, %v434
        %v436 = vpop.f32.mrb[0].mxu0
        %v437 = vadd.f32 %v357, %v436
        %438 = vdwg.mxu0
        %v439 = vmax.f32 %v421, 0.0
        %v440 = vmax.f32 %v423, 0.0
        %v441 = vmax.f32 %v425, 0.0
        %v442 = vmax.f32 %v427, 0.0
        %v443 = vmax.f32 %v431, 0.0
        %v444 = vmax.f32 %v433, 0.0
        %v445 = vmax.f32 %v435, 0.0
        %v446 = vmax.f32 %v437, 0.0
        %v447 = vld [vmem:[%s3] sm:$0xf]
        %v448 = vld [vmem:[%s3 + $0x4] sm:$0xf]
        %v449 = vld [vmem:[%s3 + $0x8] sm:$0xf]
        %v450 = vld [vmem:[%s3 + $0xc] sm:$0xf]
        %v451 = vld [vmem:[%s4] sm:$0xff]
        %v452 = vld [vmem:[%s4 + $0x8] sm:$0xff]
        %v453 = vld [vmem:[%s4 + $0x10] sm:$0xff]
        %v454 = vld [vmem:[%s4 + $0x18] sm:$0xff]
        %v455 = vpack.c.bf16 %v441, %v439
        %v456 = vpack.c.bf16 %v442, %v440
        %v457 = vpack.c.bf16 %v445, %v443
        %v458 = vpack.c.bf16 %v446, %v444
        %460 = vset.pattern.permute.xlu0 0
        %461 = vperm.xlu0 %460, %v451
        %v462 = vpop.permute.xlu0 %461
        %465 = vset.pattern.permute.xlu0 0
        %466 = vperm.xlu0 %465, %v452
        %v467 = vpop.permute.xlu0 %466
        %470 = vset.pattern.permute.xlu0 0
        %471 = vperm.xlu0 %470, %v453
        %v472 = vpop.permute.xlu0 %471
        %475 = vset.pattern.permute.xlu0 0
        %476 = vperm.xlu0 %475, %v454
        %v477 = vpop.permute.xlu0 %476
        %v483 = vunpack.c.l.b16 %v447
        %v484 = vunpack.c.l.b16 %v448
        %v485 = vunpack.c.l.b16 %v449
        %v486 = vunpack.c.l.b16 %v450
        %v487 = vpack.c.b16 %v484, %v483
        %v488 = vpack.c.b16 %v486, %v485
        %vm489 = vcmask 261120
        %v491 = vsel %vm489, %v487, 0
        %v494 = vsel %vm489, %v488, 0
        %496 = vmatprep.subr.bf16.mxu0 %v456
        %497 = vmatpush1.bf16.msra.mxu0 %v455
        %498 = vmatprep.subr.bf16.mxu0 %v458
        %499 = vmatpush1.bf16.msra.mxu0 %v457
        %500 = vmatprep.subr.bf16.mxu0 0
        %501 = vmatpush1.bf16.msra.mxu0 0
        %502 = vmatprep.subr.bf16.mxu0 0
        %503 = vmatpush1.bf16.msra.mxu0 0
        %504 = vmatprep.subr.bf16.mxu0 0
        %505 = vmatpush1.bf16.msra.mxu0 0
        %506 = vmatprep.subr.bf16.mxu0 0
        %507 = vmatpush1.bf16.msra.mxu0 0
        %508 = vmatprep.subr.bf16.mxu0 0
        %509 = vmatpush1.bf16.msra.mxu0 0
        %510 = vmatprep.subr.bf16.mxu0 0
        %511 = vmatpush1.bf16.msra.mxu0 0
        %512 = vmatprep.subr.bf16.mxu0 0
        %513 = vmatpush1.bf16.msra.mxu0 0
        %514 = vmatprep.subr.bf16.mxu0 0
        %515 = vmatpush1.bf16.msra.mxu0 0
        %516 = vmatprep.subr.bf16.mxu0 0
        %517 = vmatpush1.bf16.msra.mxu0 0
        %518 = vmatprep.subr.bf16.mxu0 0
        %519 = vmatpush1.bf16.msra.mxu0 0
        %520 = vmatprep.subr.bf16.mxu0 0
        %521 = vmatpush1.bf16.msra.mxu0 0
        %522 = vmatprep.subr.bf16.mxu0 0
        %523 = vmatpush1.bf16.msra.mxu0 0
        %524 = vmatprep.subr.bf16.mxu0 0
        %525 = vmatpush1.bf16.msra.mxu0 0
        %526 = vmatprep.subr.bf16.mxu0 0
        %527 = vmatpush1.bf16.msra.mxu0 0
        %528 = vmatprep.mubr.bf16.mxu0 0
        %529 = vmatmul.mubr.bf16.gmra.mrb[0].mxu0 %v491
        %v530 = vpop.f32.mrb[0].mxu0
        %v531 = vadd.f32 %v462, %v530
        %v532 = vpop.f32.mrb[0].mxu0
        %v533 = vadd.f32 %v462, %v532
        %v534 = vpop.f32.mrb[0].mxu0
        %v535 = vadd.f32 %v467, %v534
        %v536 = vpop.f32.mrb[0].mxu0
        %v537 = vadd.f32 %v467, %v536
        %538 = vmatprep.mubr.bf16.mxu0 0
        %539 = vmatmul.mubr.bf16.gmra.mrb[0].mxu0 %v494
        %v540 = vpop.f32.mrb[0].mxu0
        %v541 = vadd.f32 %v472, %v540
        %v542 = vpop.f32.mrb[0].mxu0
        %v543 = vadd.f32 %v472, %v542
        %v544 = vpop.f32.mrb[0].mxu0
        %v545 = vadd.f32 %v477, %v544
        %v546 = vpop.f32.mrb[0].mxu0
        %v547 = vadd.f32 %v477, %v546
        %548 = vdwg.mxu0
        %v549 = vmax.f32 %v531, 0.0
        %v550 = vmax.f32 %v533, 0.0
        %v551 = vmax.f32 %v535, 0.0
        %v552 = vmax.f32 %v537, 0.0
        %v553 = vmax.f32 %v541, 0.0
        %v554 = vmax.f32 %v543, 0.0
        %v555 = vmax.f32 %v545, 0.0
        %v556 = vmax.f32 %v547, 0.0
        %s557 = scalar_lea.vmem %s3, 16
        %v558 = vld [vmem:[%s557] sm:$0xf]
        %v559 = vld [vmem:[%s557 + $0x4] sm:$0xf]
        %v560 = vld [vmem:[%s557 + $0x8] sm:$0xf]
        %v561 = vld [vmem:[%s557 + $0xc] sm:$0xf]
        %s562 = scalar_lea.vmem %s4, 32
        %v563 = vld [vmem:[%s562] sm:$0xff]
        %v564 = vld [vmem:[%s562 + $0x8] sm:$0xff]
        %v565 = vld [vmem:[%s562 + $0x10] sm:$0xff]
        %v566 = vld [vmem:[%s562 + $0x18] sm:$0xff]
        %v567 = vpack.c.bf16 %v551, %v549
        %v568 = vpack.c.bf16 %v552, %v550
        %v569 = vpack.c.bf16 %v555, %v553
        %v570 = vpack.c.bf16 %v556, %v554
        %572 = vset.pattern.permute.xlu0 0
        %573 = vperm.xlu0 %572, %v563
        %v574 = vpop.permute.xlu0 %573
        %577 = vset.pattern.permute.xlu0 0
        %578 = vperm.xlu0 %577, %v564
        %v579 = vpop.permute.xlu0 %578
        %582 = vset.pattern.permute.xlu0 0
        %583 = vperm.xlu0 %582, %v565
        %v584 = vpop.permute.xlu0 %583
        %587 = vset.pattern.permute.xlu0 0
        %588 = vperm.xlu0 %587, %v566
        %v589 = vpop.permute.xlu0 %588
        %v595 = vunpack.c.l.b16 %v558
        %v596 = vunpack.c.l.b16 %v559
        %v597 = vunpack.c.l.b16 %v560
        %v598 = vunpack.c.l.b16 %v561
        %v599 = vpack.c.b16 %v596, %v595
        %v600 = vpack.c.b16 %v598, %v597
        %v602 = vsel %vm489, %v599, 0
        %v605 = vsel %vm489, %v600, 0
        %607 = vmatprep.subr.bf16.mxu0 %v568
        %608 = vmatpush1.bf16.msra.mxu0 %v567
        %609 = vmatprep.subr.bf16.mxu0 %v570
        %610 = vmatpush1.bf16.msra.mxu0 %v569
        %611 = vmatprep.subr.bf16.mxu0 0
        %612 = vmatpush1.bf16.msra.mxu0 0
        %613 = vmatprep.subr.bf16.mxu0 0
        %614 = vmatpush1.bf16.msra.mxu0 0
        %615 = vmatprep.subr.bf16.mxu0 0
        %616 = vmatpush1.bf16.msra.mxu0 0
        %617 = vmatprep.subr.bf16.mxu0 0
        %618 = vmatpush1.bf16.msra.mxu0 0
        %619 = vmatprep.subr.bf16.mxu0 0
        %620 = vmatpush1.bf16.msra.mxu0 0
        %621 = vmatprep.subr.bf16.mxu0 0
        %622 = vmatpush1.bf16.msra.mxu0 0
        %623 = vmatprep.subr.bf16.mxu0 0
        %624 = vmatpush1.bf16.msra.mxu0 0
        %625 = vmatprep.subr.bf16.mxu0 0
        %626 = vmatpush1.bf16.msra.mxu0 0
        %627 = vmatprep.subr.bf16.mxu0 0
        %628 = vmatpush1.bf16.msra.mxu0 0
        %629 = vmatprep.subr.bf16.mxu0 0
        %630 = vmatpush1.bf16.msra.mxu0 0
        %631 = vmatprep.subr.bf16.mxu0 0
        %632 = vmatpush1.bf16.msra.mxu0 0
        %633 = vmatprep.subr.bf16.mxu0 0
        %634 = vmatpush1.bf16.msra.mxu0 0
        %635 = vmatprep.subr.bf16.mxu0 0
        %636 = vmatpush1.bf16.msra.mxu0 0
        %637 = vmatprep.subr.bf16.mxu0 0
        %638 = vmatpush1.bf16.msra.mxu0 0
        %639 = vmatprep.mubr.bf16.mxu0 0
        %640 = vmatmul.mubr.bf16.gmra.mrb[0].mxu0 %v602
        %v641 = vpop.f32.mrb[0].mxu0
        %v642 = vadd.f32 %v574, %v641
        %v643 = vpop.f32.mrb[0].mxu0
        %v644 = vadd.f32 %v574, %v643
        %v645 = vpop.f32.mrb[0].mxu0
        %v646 = vadd.f32 %v579, %v645
        %v647 = vpop.f32.mrb[0].mxu0
        %v648 = vadd.f32 %v579, %v647
        %649 = vmatprep.mubr.bf16.mxu0 0
        %650 = vmatmul.mubr.bf16.gmra.mrb[0].mxu0 %v605
        %v651 = vpop.f32.mrb[0].mxu0
        %v652 = vadd.f32 %v584, %v651
        %v653 = vpop.f32.mrb[0].mxu0
        %v654 = vadd.f32 %v584, %v653
        %v655 = vpop.f32.mrb[0].mxu0
        %v656 = vadd.f32 %v589, %v655
        %v657 = vpop.f32.mrb[0].mxu0
        %v658 = vadd.f32 %v589, %v657
        %659 = vdwg.mxu0
        %v660 = vmax.f32 %v642, 0.0
        %v661 = vmax.f32 %v644, 0.0
        %v662 = vmax.f32 %v646, 0.0
        %v663 = vmax.f32 %v648, 0.0
        %v664 = vmax.f32 %v652, 0.0
        %v665 = vmax.f32 %v654, 0.0
        %v666 = vmax.f32 %v656, 0.0
        %v667 = vmax.f32 %v658, 0.0
        %v668 = vld [vmem:[%s5] sm:$0x3]
        %v669 = vpack.c.bf16 %v662, %v660
        %v670 = vpack.c.bf16 %v663, %v661
        %v671 = vpack.c.bf16 %v666, %v664
        %v672 = vpack.c.bf16 %v667, %v665
        %v673 = vld [vmem:[%s6] sm:$0xf]
        %675 = vset.pattern.permute.xlu0 0
        %676 = vperm.xlu0 %675, %v673
        %v677 = vpop.permute.xlu0 %676
        %v680 = vsel %vm489, %v668, 0
        %682 = vmatprep.subr.bf16.mxu0 %v670
        %683 = vmatpush1.bf16.msra.mxu0 %v669
        %684 = vmatprep.subr.bf16.mxu0 %v672
        %685 = vmatpush1.bf16.msra.mxu0 %v671
        %686 = vmatprep.subr.bf16.mxu0 0
        %687 = vmatpush1.bf16.msra.mxu0 0
        %688 = vmatprep.subr.bf16.mxu0 0
        %689 = vmatpush1.bf16.msra.mxu0 0
        %690 = vmatprep.subr.bf16.mxu0 0
        %691 = vmatpush1.bf16.msra.mxu0 0
        %692 = vmatprep.subr.bf16.mxu0 0
        %693 = vmatpush1.bf16.msra.mxu0 0
        %694 = vmatprep.subr.bf16.mxu0 0
        %695 = vmatpush1.bf16.msra.mxu0 0
        %696 = vmatprep.subr.bf16.mxu0 0
        %697 = vmatpush1.bf16.msra.mxu0 0
        %698 = vmatprep.subr.bf16.mxu0 0
        %699 = vmatpush1.bf16.msra.mxu0 0
        %700 = vmatprep.subr.bf16.mxu0 0
        %701 = vmatpush1.bf16.msra.mxu0 0
        %702 = vmatprep.subr.bf16.mxu0 0
        %703 = vmatpush1.bf16.msra.mxu0 0
        %704 = vmatprep.subr.bf16.mxu0 0
        %705 = vmatpush1.bf16.msra.mxu0 0
        %706 = vmatprep.subr.bf16.mxu0 0
        %707 = vmatpush1.bf16.msra.mxu0 0
        %708 = vmatprep.subr.bf16.mxu0 0
        %709 = vmatpush1.bf16.msra.mxu0 0
        %710 = vmatprep.subr.bf16.mxu0 0
        %711 = vmatpush1.bf16.msra.mxu0 0
        %712 = vmatprep.subr.bf16.mxu0 0
        %713 = vmatpush1.bf16.msra.mxu0 0
        %714 = vmatprep.mubr.bf16.mxu0 0
        %715 = vmatmul.mubr.bf16.gmra.mrb[0].mxu0 %v680
        %v716 = vpop.f32.mrb[0].mxu0
        %v717 = vadd.f32 %v677, %v716
        %v718 = vpop.f32.mrb[0].mxu0
        %v719 = vadd.f32 %v677, %v718
        %v720 = vpop.f32.mrb[0].mxu0
        %v721 = vpop.f32.mrb[0].mxu0
        %722 = vdwg.mxu0
        %vm723 = vcmask 1043456
        %v724 = vsel %vm723, %v717, -inf
        %v725 = vrot.slane %v724, 4
        %v726 = vmax.f32 %v724, %v725
        %v727 = vrot.slane %v726, 2
        %v728 = vmax.f32 %v726, %v727
        %v729 = vrot.slane %v728, 1
        %v730 = vmax.f32 %v728, %v729
        %v731 = vsel %vm723, %v719, -inf
        %v732 = vrot.slane %v731, 4
        %v733 = vmax.f32 %v731, %v732
        %v734 = vrot.slane %v733, 2
        %v735 = vmax.f32 %v733, %v734
        %v736 = vrot.slane %v735, 1
        %v737 = vmax.f32 %v735, %v736
        %v738 = vsub.f32 %v717, %v730
        %v739 = vsub.f32 %v719, %v737
        %v740 = vmul.f32 %v738, 1.442695
        %v741 = vpow.pop %v740
        %v742 = vmul.f32 %v739, 1.442695
        %v743 = vpow.pop %v742
        %v744 = vsel %vm723, %v741, 0.0
        %v745 = vrot.slane %v744, 4
        %v746 = vadd.f32 %v744, %v745
        %v747 = vrot.slane %v746, 2
        %v748 = vadd.f32 %v746, %v747
        %v749 = vrot.slane %v748, 1
        %v750 = vadd.f32 %v748, %v749
        %v751 = vsel %vm723, %v743, 0.0
        %v752 = vrot.slane %v751, 4
        %v753 = vadd.f32 %v751, %v752
        %v754 = vrot.slane %v753, 2
        %v755 = vadd.f32 %v753, %v754
        %v756 = vrot.slane %v755, 1
        %v757 = vadd.f32 %v755, %v756
        %v758 = vrcp.pop %v750
        %v759 = vmul.f32 %v741, %v758
        %v760 = vrcp.pop %v757
        %v761 = vmul.f32 %v743, %v760
        %v764 = vcombine.low %v759, %v761
        %766 = vst [vmem:[%s311] sm:$0xff] %v764
        %s767 = sand.u32 %s202, 1
        %s768 = scalar_lea.sflag [#allocation3], %s767
        %s769 = sand.u32 %s202, 1
        %s770 = smul.addr %s769, 8
        %s771 = scalar_lea.vmem [#allocation2], %s770
        // Predicated region
        $region49: #{tpu_custom_call.1} parent=47 // pred_check
          %p772 = pneg %p212
        $region50: #{tpu_custom_call.1} parent=47 // pred_check_branch
          %774 = sbr.rel (%p772) target = $region52
        $region51: #{tpu_custom_call.1} parent=47 // pred_region
          %s775 = smul.u32 2, %s26
          %s777 = ssub.s32 128, 128
          %778 = vsyncadd %s768, %s777
          %s779 = smul.addr %s25, 2
          %s780 = sadd.s32 %s775, %s779
          %s781 = smul.addr %s780, 64
          %s782 = scalar_lea.hbm %s7, %s781
          %s784 = sshll.u32 %s771, 4
          %s785 = int_to_ptr.vmem [resolvable:$true] %s784
          %787 = dma.vmem_to_hbm [thread:$0]  %s785, 128, %s782, %s768
        $region52: #{tpu_custom_call.1} parent=47 // pred_fallthru
          _
      $region48: #{tpu_custom_call.1} parent=5 // pred_fallthru
        _
      %p788 = scmp.le.s32.totalorder 2, %s16
      // Predicated region
      $region53: #{tpu_custom_call.1} parent=5 // pred_check
        %p789 = pneg %p788
      $region54: #{tpu_custom_call.1} parent=5 // pred_check_branch
        %791 = sbr.rel (%p789) target = $region56
      $region55: #{tpu_custom_call.1} parent=5 // pred_region
        %s792 = ssub.s32 %s16, 2
        // Predicated region
        $region57: #{tpu_custom_call.1} parent=55 // pred_check
          %p793 = pneg %p218
        $region58: #{tpu_custom_call.1} parent=55 // pred_check_branch
          %795 = sbr.rel (%p793) target = $region60
        $region59: #{tpu_custom_call.1} parent=55 // pred_region
          %s796 = sand.u32 %s203, 1
          %s797 = scalar_lea.sflag [#allocation3], %s796
          %s798 = sand.u32 %s203, 1
          %s799 = smul.addr %s798, 8
          %s800 = scalar_lea.vmem [#allocation2], %s799
          %801 = dma.done %s797, 128
        $region60: #{tpu_custom_call.1} parent=55 // pred_fallthru
          _
      $region56: #{tpu_custom_call.1} parent=5 // pred_fallthru
        _
    $region6: #{tpu_custom_call.1} parent=1 // loop_footer
      %s20 = sadd.s32 1, %s16
    $region7: #{tpu_custom_call.1} parent=1 // loop_footer_branch
      %15 = sbr.rel target = $region3
    $region8: #{tpu_custom_call.1} parent=1 // loop_exit
      _
    %802 = vsyncpa [#allocation3], 1
    %s803 = scalar_lea.sflag [#allocation3], 1
    %804 = vsyncpa %s803, 1

</llo_original>
